<compile_context>
chip_gen: v7x
topology: tpu7x:2x2x1
jax: 0.10.0
libtpu: 0.0.40
codegen_flags: <defaults>
</compile_context>

<pallas_src>
import numpy as np
import jax
import jax.numpy as jnp
from jax.experimental import pallas as pl
from jax.experimental.pallas import tpu as pltpu


def _make_gru_kernel(unroll):
    def kernel(gi_ref, whh_ref, bhhn_ref, hs_ref, h_ref):
        """One grid step = TT timesteps of the GRU recurrence for one batch block.

        gi_ref:   (TT, TB, 3*Hp)  precomputed input-side gates [r|z|n], each
                                  gate segment is Hp (128-aligned) lanes wide
        whh_ref:  (Hp, 3*Hp)      fused hidden->hidden weights (lane-padded)
        bhhn_ref: (1, Hp)         hidden bias of the n gate (stays inside r*(.))
        hs_ref:   (TT, TB, Hp)    output hidden states for this chunk
        h_ref:    (TB, Hp)        VMEM scratch: hidden state carried over time
        """
        # New batch block -> reset hidden state (time axis is grid axis 1).
        @pl.when(pl.program_id(1) == 0)
        def _():
            h_ref[...] = jnp.zeros_like(h_ref)

        tt_steps = gi_ref.shape[0]
        hdim = h_ref.shape[-1]
        w = whh_ref[...]                                      # (Hp, 3Hp), f32
        # Hoisted out of the (unrolled) time loop: JAX does not CSE broadcasts.
        b_n = jnp.broadcast_to(bhhn_ref[...], h_ref.shape)    # (TB, Hp)

        def step(tt, h):
            gi = gi_ref[tt].astype(jnp.float32)               # (TB, 3Hp)
            # One fused MXU matmul per step instead of three per-gate dots.
            gh = jnp.dot(h, w, preferred_element_type=jnp.float32)
            # sigmoid(x) == 0.5*(tanh(x/2)+1): one EUP op per gate.
            r = 0.5 * (jnp.tanh(0.5 * (gi[:, :hdim] + gh[:, :hdim])) + 1.0)
            z = 0.5 * (jnp.tanh(0.5 * (gi[:, hdim:2 * hdim]
                                       + gh[:, hdim:2 * hdim])) + 1.0)
            n = jnp.tanh(gi[:, 2 * hdim:] + r * (gh[:, 2 * hdim:] + b_n))
            h_new = n + z * (h - n)                           # == (1-z)*n + z*h
            hs_ref[tt] = h_new.astype(hs_ref.dtype)
            return h_new

        h_ref[...] = jax.lax.fori_loop(0, tt_steps, step, h_ref[...],
                                       unroll=min(unroll, tt_steps))
    return kernel


def parnet_forward(x, c, params, *, time_chunk=32, batch_block=None,
                   compute_dtype=jnp.float32, unroll=8):
    """x: (T, B, data_size) f32, c: (B, context_size) f32 -> (T, B, data_size).

    compute_dtype controls only the STORAGE dtype of the precomputed input
    gates gi and of the hs chunks written by the kernel (bf16 halves HBM/VMEM
    traffic); the hidden-state carry and all gate math stay f32 in-kernel.
    """
    T, B, Dx = x.shape
    H = params["w_hh"].shape[0]
    prec = jax.lax.Precision.HIGHEST

    w_down, b_down = params["w_down"], params["b_down"]   # (Dx+Cs, H), (1, H)
    w_ih, b_ih = params["w_ih"], params["b_ih"]           # (H, 3H), (1, 3H)
    w_hh, b_hh = params["w_hh"], params["b_hh"]           # (H, 3H), (1, 3H)
    w_up, b_up = params["w_up"], params["b_up"]           # (H, D), (1, D)

    # ---- lane padding: each gate segment is padded from H to Hp = 128*k so
    # every kernel block is lane-dense and gate slicing is 128-aligned.
    Hp = 128 * pl.cdiv(max(H, 1), 128)

    def pad_gates(a):
        # (..., 3H) -> (..., 3Hp), zero padding inside each gate segment.
        a = a.reshape(a.shape[:-1] + (3, H))
        a = jnp.pad(a, [(0, 0)] * (a.ndim - 1) + [(0, Hp - H)])
        return a.reshape(a.shape[:-2] + (3 * Hp,))

    # ---- one-time weight/bias fusion (outside the serial loop) ----
    w_g = jnp.dot(w_down, w_ih, precision=prec)            # (Dx+Cs, 3H)
    w_gx, w_gc = w_g[:Dx], w_g[Dx:]
    b_g = jnp.dot(b_down, w_ih, precision=prec) + b_ih     # (1, 3H)
    # r/z parts of b_hh fold into the bias exactly; the n part stays in r*(.)
    b_g = b_g + jnp.concatenate(
        [b_hh[:, :2 * H], jnp.zeros((1, H), b_hh.dtype)], axis=1)
    bias_b = jnp.dot(c, w_gc, precision=prec) + b_g        # (B, 3H)

    w_gx_p = pad_gates(w_gx)                               # (Dx, 3Hp)
    bias_p = pad_gates(bias_b)                             # (B, 3Hp)

    # Hidden->hidden weights / n-gate bias, lane-padded (zero padding is exact
    # because padded lanes of h remain identically zero through the scan).
    w_hh_p = jnp.pad(w_hh.reshape(H, 3, H),
                     ((0, Hp - H), (0, 0), (0, Hp - H))).reshape(Hp, 3 * Hp)
    b_hh_n = jnp.pad(b_hh[:, 2 * H:], ((0, 0), (0, Hp - H)))          # (1, Hp)

    # ---- hoisted input projection: one big parallel matmul over all T,
    # produced directly in the lane-padded layout (no gate-major transpose).
    gi = jnp.einsum("tbd,dk->tbk", x, w_gx_p, precision=prec) + bias_p[None]
    gi = gi.astype(compute_dtype)                          # (T, B, 3Hp)

    # ---- blocking: batch to sublane multiples, time to a VMEM-sized chunk ----
    Bp = 8 * pl.cdiv(B, 8)
    if batch_block is None:
        TB = Bp                      # 1 batch block; set smaller on multi-TC chips
    else:
        TB = 8 * pl.cdiv(min(batch_block, Bp), 8)
        Bp = TB * pl.cdiv(Bp, TB)

    itemsize = np.dtype(compute_dtype).itemsize
    per_step_bytes = 4 * Hp * TB * itemsize                # gi (3Hp) + hs (Hp)
    tt_cap = max(1, (24 << 20) // (2 * per_step_bytes))    # keep 2-deep pipeline
    TT = max(1, min(time_chunk, T, tt_cap))
    Tp = TT * pl.cdiv(T, TT)

    gi = jnp.pad(gi, ((0, Tp - T), (0, Bp - B), (0, 0)))

    vmem_limit = int(min(
        max(2 * TT * TB * 4 * Hp * itemsize                # gi + hs, x2 buffers
            + 2 * (Hp * 3 * Hp + Hp) * 4                   # weights + n bias
            + TB * Hp * 4                                  # h scratch
            + (8 << 20),                                   # headroom
            32 << 20),
        64 << 20))

    hs = pl.pallas_call(
        _make_gru_kernel(unroll),
        out_shape=jax.ShapeDtypeStruct((Tp, Bp, Hp), compute_dtype),
        grid_spec=pltpu.PrefetchScalarGridSpec(
            num_scalar_prefetch=0,
            grid=(Bp // TB, Tp // TT),
            in_specs=[
                pl.BlockSpec((TT, TB, 3 * Hp), lambda b, t: (t, b, 0)),
                pl.BlockSpec((Hp, 3 * Hp), lambda b, t: (0, 0)),
                pl.BlockSpec((1, Hp), lambda b, t: (0, 0)),
            ],
            out_specs=pl.BlockSpec((TT, TB, Hp), lambda b, t: (t, b, 0)),
            scratch_shapes=[pltpu.VMEM((TB, Hp), jnp.float32)],
        ),
        compiler_params=pltpu.CompilerParams(
            # Batch blocks are independent (megacore-parallel on multi-TC
            # chips); the recurrence is serial in time -> "arbitrary".
            dimension_semantics=("parallel", "arbitrary"),
            vmem_limit_bytes=vmem_limit),
    )(gi, w_hh_p, b_hh_n)

    hs = hs[:T, :B]                                        # drop T/B padding

    # ---- hoisted up-Linear: padded hs lanes are exactly zero, so zero-padding
    # w_up's input rows keeps the matmul exact without any lane slicing.
    w_up_p = jnp.pad(w_up, ((0, Hp - H), (0, 0)))
    return (jnp.einsum("tbh,hd->tbd", hs.astype(jnp.float32), w_up_p,
                       precision=prec) + b_up[0])


def parnet_reference(x, c, params):
    """Pure-JAX reference of the original (unfused) forward pass."""
    T, B, _ = x.shape
    H = params["w_hh"].shape[0]
    prec = jax.lax.Precision.HIGHEST
    ctx = jnp.broadcast_to(c[None, :, :], (T, c.shape[0], c.shape[1]))
    xc = jnp.concatenate([x, ctx], axis=2)
    d = jnp.einsum("tbi,ih->tbh", xc, params["w_down"], precision=prec) \
        + params["b_down"][0]

    def step(h, x_t):
        gi = jnp.dot(x_t, params["w_ih"], precision=prec) + params["b_ih"][0]
        gh = jnp.dot(h, params["w_hh"], precision=prec) + params["b_hh"][0]
        i_r, i_z, i_n = gi[:, :H], gi[:, H:2 * H], gi[:, 2 * H:]
        h_r, h_z, h_n = gh[:, :H], gh[:, H:2 * H], gh[:, 2 * H:]
        r = jax.nn.sigmoid(i_r + h_r)
        z = jax.nn.sigmoid(i_z + h_z)
        n = jnp.tanh(i_n + r * h_n)
        h_new = (1.0 - z) * n + z * h
        return h_new, h_new

    h0 = jnp.zeros((B, H), jnp.float32)
    _, hs = jax.lax.scan(step, h0, d)
    return jnp.einsum("tbh,hd->tbd", hs, params["w_up"], precision=prec) \
        + params["b_up"][0]


def init_params(key, data_size, context_size, hidden_size):
    din = data_size + context_size
    ks = jax.random.split(key, 8)
    s = 0.1
    return {
        # Linear `down`: stored transposed -> (in, out)
        "w_down": s * jax.random.normal(ks[0], (din, hidden_size), jnp.float32),
        "b_down": s * jax.random.normal(ks[1], (1, hidden_size), jnp.float32),
        # GRU weights, stored as (H, 3H) in [r|z|n] order (transposed vs torch)
        "w_ih": s * jax.random.normal(ks[2], (hidden_size, 3 * hidden_size), jnp.float32),
        "b_ih": s * jax.random.normal(ks[3], (1, 3 * hidden_size), jnp.float32),
        "w_hh": s * jax.random.normal(ks[4], (hidden_size, 3 * hidden_size), jnp.float32),
        "b_hh": s * jax.random.normal(ks[5], (1, 3 * hidden_size), jnp.float32),
        # Linear `up`
        "w_up": s * jax.random.normal(ks[6], (hidden_size, data_size), jnp.float32),
        "b_up": s * jax.random.normal(ks[7], (1, data_size), jnp.float32),
    }


if __name__ == "__main__":
    data_size, context_size, hidden_size = 6, 4, 32
    T, B = 8, 2

    key = jax.random.PRNGKey(0)
    kx, kc, kp = jax.random.split(key, 3)
    x = jax.random.normal(kx, (T, B, data_size), jnp.float32)
    c = jax.random.normal(kc, (B, context_size), jnp.float32)
    params = init_params(kp, data_size, context_size, hidden_size)

    ref = parnet_reference(x, c, params)

    # time_chunk=3 deliberately exercises the multi-chunk hidden-state carry
    # (time grid of 3) and the time-padding path (T=8 -> Tp=9).
    out = parnet_forward(x, c, params, time_chunk=3)
    out = jax.block_until_ready(out)
    assert out.shape == (T, B, data_size)
    assert jnp.allclose(out, ref, atol=1e-3, rtol=1e-3), (
        "f32 mismatch vs reference: max abs err "
        f"{jnp.max(jnp.abs(out - ref)):.3e}")

    # bf16 storage path for gi / hs (f32 carry + gate math inside the kernel).
    out_bf16 = parnet_forward(x, c, params, time_chunk=4,
                              compute_dtype=jnp.bfloat16)
    out_bf16 = jax.block_until_ready(out_bf16)
    assert jnp.allclose(out_bf16, ref, atol=5e-2, rtol=5e-2), (
        "bf16 mismatch vs reference: max abs err "
        f"{jnp.max(jnp.abs(out_bf16 - ref)):.3e}")

    print("KERNEL_OK")
</pallas_src>

<mosaic_0001>
module attributes {stable_mosaic.version = 11 : i64} {
  func.func @kernel(%arg0: i32, %arg1: i32, %arg2: memref<3x8x384xf32, #tpu.memory_space<vmem>>, %arg3: memref<128x384xf32, #tpu.memory_space<vmem>>, %arg4: memref<1x128xf32, #tpu.memory_space<vmem>>, %arg5: memref<3x8x128xf32, #tpu.memory_space<vmem>>, %arg6: memref<8x128xf32, #tpu.memory_space<vmem>>) attributes {dimension_semantics = [#tpu.dimension_semantics<parallel>, #tpu.dimension_semantics<arbitrary>], iteration_bounds = array<i64: 1, 3>, scalar_prefetch = 0 : i64, scratch_operands = 1 : i64, tpu.core_type = #tpu.core_type<tc>, window_params = [{transform_indices = @transform_0, window_bounds = array<i64: 3, 8, 384>}, {pipeline_mode = #tpu.pipeline_mode<synchronous>, transform_indices = @transform_1, window_bounds = array<i64: 128, 384>}, {pipeline_mode = #tpu.pipeline_mode<synchronous>, transform_indices = @transform_2, window_bounds = array<i64: 1, 128>}, {transform_indices = @transform_3, window_bounds = array<i64: 3, 8, 128>}]} {
    %c0_i32 = arith.constant 0 : i32
    %0 = arith.cmpi eq, %arg1, %c0_i32 : i32
    %1 = arith.extui %0 : i1 to i32
    %c0_i32_0 = arith.constant 0 : i32
    %2 = arith.cmpi ne, %1, %c0_i32_0 : i32
    scf.if %2 {
      %cst_41 = arith.constant 0.000000e+00 : f32
      %120 = vector.broadcast %cst_41 : f32 to vector<8x128xf32>
      %c0_42 = arith.constant 0 : index
      %c0_43 = arith.constant 0 : index
      %121 = vector.load %arg6[%c0_42, %c0_43] : memref<8x128xf32, #tpu.memory_space<vmem>>, vector<8x128xf32>
      tpu.vector_store %arg6[%c0_42, %c0_43], %120 {strides = array<i32>} : memref<8x128xf32, #tpu.memory_space<vmem>>, vector<8x128xf32>,
    } else {
    }
    %c0 = arith.constant 0 : index
    %c0_1 = arith.constant 0 : index
    %3 = vector.load %arg3[%c0, %c0_1] : memref<128x384xf32, #tpu.memory_space<vmem>>, vector<128x384xf32>
    %c0_2 = arith.constant 0 : index
    %c0_3 = arith.constant 0 : index
    %4 = vector.load %arg4[%c0_2, %c0_3] : memref<1x128xf32, #tpu.memory_space<vmem>>, vector<1x128xf32>
    %5 = vector.shape_cast %4 : vector<1x128xf32> to vector<1x128xf32>
    %6 = vector.broadcast %5 : vector<1x128xf32> to vector<8x128xf32>
    %c0_4 = arith.constant 0 : index
    %c0_5 = arith.constant 0 : index
    %7 = vector.load %arg6[%c0_4, %c0_5] : memref<8x128xf32, #tpu.memory_space<vmem>>, vector<8x128xf32>
    %c0_i32_6 = arith.constant 0 : i32
    %8 = arith.index_cast %c0_i32_6 : i32 to index
    %c0_7 = arith.constant 0 : index
    %c0_8 = arith.constant 0 : index
    %9 = vector.load %arg2[%8, %c0_7, %c0_8] : memref<3x8x384xf32, #tpu.memory_space<vmem>>, vector<1x8x384xf32>
    %10 = vector.shape_cast %9 : vector<1x8x384xf32> to vector<8x384xf32>
    %cst = arith.constant dense<0.000000e+00> : vector<8x384xf32>
    %11 = tpu.matmul %7, %3, %cst {dimension_numbers = #tpu.dot_dimension_numbers<[1], [0], [0], [1], [0, 0, 1, 1], [], []>} : vector<8x128xf32>, vector<128x384xf32>, vector<8x384xf32> -> vector<8x384xf32>
    %12 = vector.extract_strided_slice %10 {offsets = [0, 0], sizes = [8, 128], strides = [1, 1]} : vector<8x384xf32> to vector<8x128xf32>
    %13 = vector.extract_strided_slice %11 {offsets = [0, 0], sizes = [8, 128], strides = [1, 1]} : vector<8x384xf32> to vector<8x128xf32>
    %14 = arith.addf %12, %13 : vector<8x128xf32>
    %cst_9 = arith.constant 5.000000e-01 : f32
    %15 = vector.broadcast %cst_9 : f32 to vector<8x128xf32>
    %16 = arith.mulf %15, %14 : vector<8x128xf32>
    %17 = math.tanh %16 : vector<8x128xf32>
    %cst_10 = arith.constant 1.000000e+00 : f32
    %18 = vector.broadcast %cst_10 : f32 to vector<8x128xf32>
    %19 = arith.addf %17, %18 : vector<8x128xf32>
    %cst_11 = arith.constant 5.000000e-01 : f32
    %20 = vector.broadcast %cst_11 : f32 to vector<8x128xf32>
    %21 = arith.mulf %20, %19 : vector<8x128xf32>
    %22 = vector.extract_strided_slice %10 {offsets = [0, 128], sizes = [8, 128], strides = [1, 1]} : vector<8x384xf32> to vector<8x128xf32>
    %23 = vector.extract_strided_slice %11 {offsets = [0, 128], sizes = [8, 128], strides = [1, 1]} : vector<8x384xf32> to vector<8x128xf32>
    %24 = arith.addf %22, %23 : vector<8x128xf32>
    %cst_12 = arith.constant 5.000000e-01 : f32
    %25 = vector.broadcast %cst_12 : f32 to vector<8x128xf32>
    %26 = arith.mulf %25, %24 : vector<8x128xf32>
    %27 = math.tanh %26 : vector<8x128xf32>
    %cst_13 = arith.constant 1.000000e+00 : f32
    %28 = vector.broadcast %cst_13 : f32 to vector<8x128xf32>
    %29 = arith.addf %27, %28 : vector<8x128xf32>
    %cst_14 = arith.constant 5.000000e-01 : f32
    %30 = vector.broadcast %cst_14 : f32 to vector<8x128xf32>
    %31 = arith.mulf %30, %29 : vector<8x128xf32>
    %32 = vector.extract_strided_slice %10 {offsets = [0, 256], sizes = [8, 128], strides = [1, 1]} : vector<8x384xf32> to vector<8x128xf32>
    %33 = vector.extract_strided_slice %11 {offsets = [0, 256], sizes = [8, 128], strides = [1, 1]} : vector<8x384xf32> to vector<8x128xf32>
    %34 = arith.addf %33, %6 : vector<8x128xf32>
    %35 = arith.mulf %21, %34 : vector<8x128xf32>
    %36 = arith.addf %32, %35 : vector<8x128xf32>
    %37 = math.tanh %36 : vector<8x128xf32>
    %38 = arith.subf %7, %37 : vector<8x128xf32>
    %39 = arith.mulf %31, %38 : vector<8x128xf32>
    %40 = arith.addf %37, %39 : vector<8x128xf32>
    %41 = arith.index_cast %c0_i32_6 : i32 to index
    %c0_15 = arith.constant 0 : index
    %c0_16 = arith.constant 0 : index
    %42 = vector.load %arg5[%41, %c0_15, %c0_16] : memref<3x8x128xf32, #tpu.memory_space<vmem>>, vector<1x8x128xf32>
    %43 = vector.shape_cast %42 : vector<1x8x128xf32> to vector<8x128xf32>
    %44 = vector.shape_cast %40 : vector<8x128xf32> to vector<1x8x128xf32>
    tpu.vector_store %arg5[%41, %c0_15, %c0_16], %44 {strides = array<i32>} : memref<3x8x128xf32, #tpu.memory_space<vmem>>, vector<1x8x128xf32>,
    %c1_i32 = arith.constant 1 : i32
    %45 = arith.index_cast %c1_i32 : i32 to index
    %c0_17 = arith.constant 0 : index
    %c0_18 = arith.constant 0 : index
    %46 = vector.load %arg2[%45, %c0_17, %c0_18] : memref<3x8x384xf32, #tpu.memory_space<vmem>>, vector<1x8x384xf32>
    %47 = vector.shape_cast %46 : vector<1x8x384xf32> to vector<8x384xf32>
    %cst_19 = arith.constant dense<0.000000e+00> : vector<8x384xf32>
    %48 = tpu.matmul %40, %3, %cst_19 {dimension_numbers = #tpu.dot_dimension_numbers<[1], [0], [0], [1], [0, 0, 1, 1], [], []>} : vector<8x128xf32>, vector<128x384xf32>, vector<8x384xf32> -> vector<8x384xf32>
    %49 = vector.extract_strided_slice %47 {offsets = [0, 0], sizes = [8, 128], strides = [1, 1]} : vector<8x384xf32> to vector<8x128xf32>
    %50 = vector.extract_strided_slice %48 {offsets = [0, 0], sizes = [8, 128], strides = [1, 1]} : vector<8x384xf32> to vector<8x128xf32>
    %51 = arith.addf %49, %50 : vector<8x128xf32>
    %cst_20 = arith.constant 5.000000e-01 : f32
    %52 = vector.broadcast %cst_20 : f32 to vector<8x128xf32>
    %53 = arith.mulf %52, %51 : vector<8x128xf32>
    %54 = math.tanh %53 : vector<8x128xf32>
    %cst_21 = arith.constant 1.000000e+00 : f32
    %55 = vector.broadcast %cst_21 : f32 to vector<8x128xf32>
    %56 = arith.addf %54, %55 : vector<8x128xf32>
    %cst_22 = arith.constant 5.000000e-01 : f32
    %57 = vector.broadcast %cst_22 : f32 to vector<8x128xf32>
    %58 = arith.mulf %57, %56 : vector<8x128xf32>
    %59 = vector.extract_strided_slice %47 {offsets = [0, 128], sizes = [8, 128], strides = [1, 1]} : vector<8x384xf32> to vector<8x128xf32>
    %60 = vector.extract_strided_slice %48 {offsets = [0, 128], sizes = [8, 128], strides = [1, 1]} : vector<8x384xf32> to vector<8x128xf32>
    %61 = arith.addf %59, %60 : vector<8x128xf32>
    %cst_23 = arith.constant 5.000000e-01 : f32
    %62 = vector.broadcast %cst_23 : f32 to vector<8x128xf32>
    %63 = arith.mulf %62, %61 : vector<8x128xf32>
    %64 = math.tanh %63 : vector<8x128xf32>
    %cst_24 = arith.constant 1.000000e+00 : f32
    %65 = vector.broadcast %cst_24 : f32 to vector<8x128xf32>
    %66 = arith.addf %64, %65 : vector<8x128xf32>
    %cst_25 = arith.constant 5.000000e-01 : f32
    %67 = vector.broadcast %cst_25 : f32 to vector<8x128xf32>
    %68 = arith.mulf %67, %66 : vector<8x128xf32>
    %69 = vector.extract_strided_slice %47 {offsets = [0, 256], sizes = [8, 128], strides = [1, 1]} : vector<8x384xf32> to vector<8x128xf32>
    %70 = vector.extract_strided_slice %48 {offsets = [0, 256], sizes = [8, 128], strides = [1, 1]} : vector<8x384xf32> to vector<8x128xf32>
    %71 = arith.addf %70, %6 : vector<8x128xf32>
    %72 = arith.mulf %58, %71 : vector<8x128xf32>
    %73 = arith.addf %69, %72 : vector<8x128xf32>
    %74 = math.tanh %73 : vector<8x128xf32>
    %75 = arith.subf %40, %74 : vector<8x128xf32>
    %76 = arith.mulf %68, %75 : vector<8x128xf32>
    %77 = arith.addf %74, %76 : vector<8x128xf32>
    %78 = arith.index_cast %c1_i32 : i32 to index
    %c0_26 = arith.constant 0 : index
    %c0_27 = arith.constant 0 : index
    %79 = vector.load %arg5[%78, %c0_26, %c0_27] : memref<3x8x128xf32, #tpu.memory_space<vmem>>, vector<1x8x128xf32>
    %80 = vector.shape_cast %79 : vector<1x8x128xf32> to vector<8x128xf32>
    %81 = vector.shape_cast %77 : vector<8x128xf32> to vector<1x8x128xf32>
    tpu.vector_store %arg5[%78, %c0_26, %c0_27], %81 {strides = array<i32>} : memref<3x8x128xf32, #tpu.memory_space<vmem>>, vector<1x8x128xf32>,
    %c2_i32 = arith.constant 2 : i32
    %82 = arith.index_cast %c2_i32 : i32 to index
    %c0_28 = arith.constant 0 : index
    %c0_29 = arith.constant 0 : index
    %83 = vector.load %arg2[%82, %c0_28, %c0_29] : memref<3x8x384xf32, #tpu.memory_space<vmem>>, vector<1x8x384xf32>
    %84 = vector.shape_cast %83 : vector<1x8x384xf32> to vector<8x384xf32>
    %cst_30 = arith.constant dense<0.000000e+00> : vector<8x384xf32>
    %85 = tpu.matmul %77, %3, %cst_30 {dimension_numbers = #tpu.dot_dimension_numbers<[1], [0], [0], [1], [0, 0, 1, 1], [], []>} : vector<8x128xf32>, vector<128x384xf32>, vector<8x384xf32> -> vector<8x384xf32>
    %86 = vector.extract_strided_slice %84 {offsets = [0, 0], sizes = [8, 128], strides = [1, 1]} : vector<8x384xf32> to vector<8x128xf32>
    %87 = vector.extract_strided_slice %85 {offsets = [0, 0], sizes = [8, 128], strides = [1, 1]} : vector<8x384xf32> to vector<8x128xf32>
    %88 = arith.addf %86, %87 : vector<8x128xf32>
    %cst_31 = arith.constant 5.000000e-01 : f32
    %89 = vector.broadcast %cst_31 : f32 to vector<8x128xf32>
    %90 = arith.mulf %89, %88 : vector<8x128xf32>
    %91 = math.tanh %90 : vector<8x128xf32>
    %cst_32 = arith.constant 1.000000e+00 : f32
    %92 = vector.broadcast %cst_32 : f32 to vector<8x128xf32>
    %93 = arith.addf %91, %92 : vector<8x128xf32>
    %cst_33 = arith.constant 5.000000e-01 : f32
    %94 = vector.broadcast %cst_33 : f32 to vector<8x128xf32>
    %95 = arith.mulf %94, %93 : vector<8x128xf32>
    %96 = vector.extract_strided_slice %84 {offsets = [0, 128], sizes = [8, 128], strides = [1, 1]} : vector<8x384xf32> to vector<8x128xf32>
    %97 = vector.extract_strided_slice %85 {offsets = [0, 128], sizes = [8, 128], strides = [1, 1]} : vector<8x384xf32> to vector<8x128xf32>
    %98 = arith.addf %96, %97 : vector<8x128xf32>
    %cst_34 = arith.constant 5.000000e-01 : f32
    %99 = vector.broadcast %cst_34 : f32 to vector<8x128xf32>
    %100 = arith.mulf %99, %98 : vector<8x128xf32>
    %101 = math.tanh %100 : vector<8x128xf32>
    %cst_35 = arith.constant 1.000000e+00 : f32
    %102 = vector.broadcast %cst_35 : f32 to vector<8x128xf32>
    %103 = arith.addf %101, %102 : vector<8x128xf32>
    %cst_36 = arith.constant 5.000000e-01 : f32
    %104 = vector.broadcast %cst_36 : f32 to vector<8x128xf32>
    %105 = arith.mulf %104, %103 : vector<8x128xf32>
    %106 = vector.extract_strided_slice %84 {offsets = [0, 256], sizes = [8, 128], strides = [1, 1]} : vector<8x384xf32> to vector<8x128xf32>
    %107 = vector.extract_strided_slice %85 {offsets = [0, 256], sizes = [8, 128], strides = [1, 1]} : vector<8x384xf32> to vector<8x128xf32>
    %108 = arith.addf %107, %6 : vector<8x128xf32>
    %109 = arith.mulf %95, %108 : vector<8x128xf32>
    %110 = arith.addf %106, %109 : vector<8x128xf32>
    %111 = math.tanh %110 : vector<8x128xf32>
    %112 = arith.subf %77, %111 : vector<8x128xf32>
    %113 = arith.mulf %105, %112 : vector<8x128xf32>
    %114 = arith.addf %111, %113 : vector<8x128xf32>
    %115 = arith.index_cast %c2_i32 : i32 to index
    %c0_37 = arith.constant 0 : index
    %c0_38 = arith.constant 0 : index
    %116 = vector.load %arg5[%115, %c0_37, %c0_38] : memref<3x8x128xf32, #tpu.memory_space<vmem>>, vector<1x8x128xf32>
    %117 = vector.shape_cast %116 : vector<1x8x128xf32> to vector<8x128xf32>
    %118 = vector.shape_cast %114 : vector<8x128xf32> to vector<1x8x128xf32>
    tpu.vector_store %arg5[%115, %c0_37, %c0_38], %118 {strides = array<i32>} : memref<3x8x128xf32, #tpu.memory_space<vmem>>, vector<1x8x128xf32>,
    %c3_i32 = arith.constant 3 : i32
    %c0_39 = arith.constant 0 : index
    %c0_40 = arith.constant 0 : index
    %119 = vector.load %arg6[%c0_39, %c0_40] : memref<8x128xf32, #tpu.memory_space<vmem>>, vector<8x128xf32>
    tpu.vector_store %arg6[%c0_39, %c0_40], %114 {strides = array<i32>} : memref<8x128xf32, #tpu.memory_space<vmem>>, vector<8x128xf32>,
    return
  }
  func.func @transform_0(%arg0: i32, %arg1: i32) -> (i32, i32, i32) {
    %c0_i32 = arith.constant 0 : i32
    %c0_i32_0 = arith.constant 0 : i32
    return %arg1, %arg0, %c0_i32 : i32, i32, i32
  }
  func.func @transform_1(%arg0: i32, %arg1: i32) -> (i32, i32) {
    %c0_i32 = arith.constant 0 : i32
    %c0_i32_0 = arith.constant 0 : i32
    %c0_i32_1 = arith.constant 0 : i32
    return %c0_i32, %c0_i32_0 : i32, i32
  }
  func.func @transform_2(%arg0: i32, %arg1: i32) -> (i32, i32) {
    %c0_i32 = arith.constant 0 : i32
    %c0_i32_0 = arith.constant 0 : i32
    %c0_i32_1 = arith.constant 0 : i32
    return %c0_i32, %c0_i32_0 : i32, i32
  }
  func.func @transform_3(%arg0: i32, %arg1: i32) -> (i32, i32, i32) {
    %c0_i32 = arith.constant 0 : i32
    %c0_i32_0 = arith.constant 0 : i32
    return %arg1, %arg0, %c0_i32 : i32, i32, i32
  }
}

</mosaic_0001>

<llo_original>
// kernel: tpu_custom_call.1
$region0: #{tpu_custom_call.1}
  #allocation0 [shape = 'u32[]', space=smem, size = 0x4, offset = 0x4, fixed_abs, tag = 'smem constant byte address 0x4 - core index']
  #allocation1 [shape = 'u32[144,128]{1,0:T(1,128)}', space=vmem, size = 0x12000, scoped, tag = 'internal scratch']
  #allocation2 [shape = 'f32[8,128]{1,0:T(8,128)}', space=vmem, size = 0x1000, scoped, tag = 'scratch operand']
  %s0 = inlined_call_operand.hbm [shape: f32[9,8,384], index: 0, kind: input, shape index: {}]
  %s1 = inlined_call_operand.hbm [shape: f32[128,384], index: 1, kind: input, shape index: {}]
  %s2 = inlined_call_operand.vmem [shape: f32[1,128], index: 2, kind: input, shape index: {}]
  %s3 = inlined_call_operand.hbm [shape: f32[9,8,128], index: 3, kind: output, shape index: {}]
  %s4 = sld [smem:[#allocation0]]
  $region57: #{tpu_custom_call.1} parent=0
    _
  %s6 = ssub.s32 1, %s4
  %s7 = scalar_select 0, %s6, %s4
  $region1: #{tpu_custom_call.1} parent=0
    #allocation3 [shape = 'u8[73728]{0}', space=vmem, size = 0x12000, scoped, tag = 'input window, operand 0']
    #allocation4 [shape = 's32[2]{0}', space=sflag, size = 0x8, scoped, tag = 'scoped memory for tpu_custom_call.1']
    #allocation5 [shape = 's32[2]{0}', space=sflag, size = 0x8, scoped, tag = 'scoped memory for tpu_custom_call.1']
    #allocation6 [shape = 'u8[196608]{0}', space=vmem, size = 0x30000, scoped, tag = 'input window, operand 1, single buffered']
    #allocation7 [shape = 's32[1]{0}', space=sflag, size = 0x4, scoped, tag = 'scoped memory for tpu_custom_call.1']
    #allocation8 [shape = 'u8[24576]{0}', space=vmem, size = 0x6000, scoped, tag = 'output window, operand 0']
    %8 = vsyncpa [#allocation4], 0
    %s9 = scalar_lea.sflag [#allocation4], 1
    %10 = vsyncpa %s9, 0
    %11 = vsyncpa [#allocation7], 0
    %12 = vsyncpa [#allocation5], 0
    %s13 = scalar_lea.sflag [#allocation5], 1
    %14 = vsyncpa %s13, 0
    loop: start=0, step=1, limit=5
    $region2: #{tpu_custom_call.1} parent=1 // loop_pre_header
      _
    $region3: #{tpu_custom_call.1} parent=1 // loop_header
      %s16 = sphi 0, %s20
      %p17 = scmp.ge.s32.totalorder %s16, 5
      %s23 = sphi 0, %s35
      %s24 = sphi 0, %s31
      %s25 = sphi 0, %s23
      %s26 = sphi 0, %s24
      %s27 = sphi 0, %s25
      %s28 = sphi 0, %s26
      %s40 = sphi 0, %s42
      %s43 = sphi 0, %s40
      %s44 = sphi 0, %s43
      %s60 = sphi 0, %s44
      %s64 = sphi 0, %s64
      %s66 = sphi 0, %s64
      %s67 = sphi 0, %s66
      %s81 = sphi 0, %s67
      %s85 = sphi 0, %s85
      %s87 = sphi 0, %s85
      %s88 = sphi 0, %s87
      %s102 = sphi 0, %s88
      %s110 = sphi 0, %s112
      %s113 = sphi 0, %s110
      %s114 = sphi 0, %s113
      %s130 = sphi 0, %s114
    $region4: #{tpu_custom_call.1} parent=1 // loop_header_branch
      %19 = sbr.rel (%p17) target = $region8
    $region5: #{tpu_custom_call.1} parent=1 // loop_body
      %s21 = ssub.s32 %s16, 1
      %s22 = ssub.s32 %s16, 2
      %s29 = sadd.s32 1, %s24
      %p30 = scmp.ge.s32.totalorder %s29, 3
      %s31 = scalar_select %p30, 0, %s29
      %s32 = sadd.s32 1, %s23
      %s33 = scalar_select %p30, %s32, %s23
      %p34 = scmp.ge.s32.totalorder %s33, 1
      %s35 = scalar_select %p34, 0, %s33
      %s36 = ssub.s32 %s24, %s31
      %s37 = ssub.s32 %s23, %s35
      %s38 = sor.u32 %s36, %s37
      %p39 = scmp.eq.s32.totalorder %s38, 0
      %s41 = sadd.s32 %s40, 1
      %s42 = scalar_select %p39, %s40, %s41
      %p45 = pneg %p39
      %p46 = scmp.eq.s32.totalorder %s16, 2
      %p47 = por %p45, %p46
      %p48 = scmp.ne.s32.totalorder %s40, %s43
      %p49 = scmp.eq.s32.totalorder %s16, 0
      %p50 = por %p48, %p49
      %p51 = scmp.ne.s32.totalorder %s40, %s43
      %p52 = scmp.eq.s32.totalorder %s21, 2
      %p53 = por %p51, %p52
      %p54 = scmp.ne.s32.totalorder %s43, %s44
      %p55 = scmp.eq.s32.totalorder %s21, 0
      %p56 = por %p54, %p55
      %p57 = scmp.ne.s32.totalorder %s43, %s44
      %p58 = scmp.eq.s32.totalorder %s22, 2
      %p59 = por %p57, %p58
      %p61 = scmp.ne.s32.totalorder %s44, %s60
      %p62 = scmp.eq.s32.totalorder %s22, 0
      %p63 = por %p61, %p62
      %s65 = sadd.s32 %s64, 1
      %p68 = scmp.eq.s32.totalorder %s16, 2
      %p69 = scmp.ne.s32.totalorder %s64, %s66
      %p70 = scmp.eq.s32.totalorder %s16, 0
      %p71 = por %p69, %p70
      %p72 = scmp.ne.s32.totalorder %s64, %s66
      %p73 = scmp.eq.s32.totalorder %s21, 2
      %p74 = por %p72, %p73
      %p75 = scmp.ne.s32.totalorder %s66, %s67
      %p76 = scmp.eq.s32.totalorder %s21, 0
      %p77 = por %p75, %p76
      %p78 = scmp.ne.s32.totalorder %s66, %s67
      %p79 = scmp.eq.s32.totalorder %s22, 2
      %p80 = por %p78, %p79
      %p82 = scmp.ne.s32.totalorder %s67, %s81
      %p83 = scmp.eq.s32.totalorder %s22, 0
      %p84 = por %p82, %p83
      %s86 = sadd.s32 %s85, 1
      %p89 = scmp.eq.s32.totalorder %s16, 2
      %p90 = scmp.ne.s32.totalorder %s85, %s87
      %p91 = scmp.eq.s32.totalorder %s16, 0
      %p92 = por %p90, %p91
      %p93 = scmp.ne.s32.totalorder %s85, %s87
      %p94 = scmp.eq.s32.totalorder %s21, 2
      %p95 = por %p93, %p94
      %p96 = scmp.ne.s32.totalorder %s87, %s88
      %p97 = scmp.eq.s32.totalorder %s21, 0
      %p98 = por %p96, %p97
      %p99 = scmp.ne.s32.totalorder %s87, %s88
      %p100 = scmp.eq.s32.totalorder %s22, 2
      %p101 = por %p99, %p100
      %p103 = scmp.ne.s32.totalorder %s88, %s102
      %p104 = scmp.eq.s32.totalorder %s22, 0
      %p105 = por %p103, %p104
      %s106 = ssub.s32 %s24, %s31
      %s107 = ssub.s32 %s23, %s35
      %s108 = sor.u32 %s106, %s107
      %p109 = scmp.eq.s32.totalorder %s108, 0
      %s111 = sadd.s32 %s110, 1
      %s112 = scalar_select %p109, %s110, %s111
      %p115 = pneg %p109
      %p116 = scmp.eq.s32.totalorder %s16, 2
      %p117 = por %p115, %p116
      %p118 = scmp.ne.s32.totalorder %s110, %s113
      %p119 = scmp.eq.s32.totalorder %s16, 0
      %p120 = por %p118, %p119
      %p121 = scmp.ne.s32.totalorder %s110, %s113
      %p122 = scmp.eq.s32.totalorder %s21, 2
      %p123 = por %p121, %p122
      %p124 = scmp.ne.s32.totalorder %s113, %s114
      %p125 = scmp.eq.s32.totalorder %s21, 0
      %p126 = por %p124, %p125
      %p127 = scmp.ne.s32.totalorder %s113, %s114
      %p128 = scmp.eq.s32.totalorder %s22, 2
      %p129 = por %p127, %p128
      %p131 = scmp.ne.s32.totalorder %s114, %s130
      %p132 = scmp.eq.s32.totalorder %s22, 0
      %p133 = por %p131, %p132
      %p134 = scmp.le.s32.totalorder 1, %s16
      %p135 = scmp.lt.s32.totalorder %s16, 4
      %p136 = pnand %p134, %p135
      %p137 = pneg %p136
      // Predicated region
      $region9: #{tpu_custom_call.1} parent=5 // pred_check
        _
      $region10: #{tpu_custom_call.1} parent=5 // pred_check_branch
        %139 = sbr.rel (%p136) target = $region12
      $region11: #{tpu_custom_call.1} parent=5 // pred_region
        %s140 = ssub.s32 %s16, 1
        // Predicated region
        $region13: #{tpu_custom_call.1} parent=11 // pred_check
          %p141 = pneg %p77
        $region14: #{tpu_custom_call.1} parent=11 // pred_check_branch
          %143 = sbr.rel (%p141) target = $region16
        $region15: #{tpu_custom_call.1} parent=11 // pred_region
          %s145 = ssub.s32 6144, 6144
          %146 = vsyncadd [#allocation7], %s145
          %s147 = sshll.u32 [#allocation6], 4
          %s148 = int_to_ptr.vmem [resolvable:$true] %s147
          %153 = dma.hbm_to_vmem [thread:$0]  %s1, 6144, %s148, [#allocation7], 384, 384, 24
        $region16: #{tpu_custom_call.1} parent=11 // pred_fallthru
          _
        // Predicated region
        $region17: #{tpu_custom_call.1} parent=11 // pred_check
          %p154 = pneg %p98
        $region18: #{tpu_custom_call.1} parent=11 // pred_check_branch
          %156 = sbr.rel (%p154) target = $region20
        $region19: #{tpu_custom_call.1} parent=11 // pred_region
          _
        $region20: #{tpu_custom_call.1} parent=11 // pred_fallthru
          _
      $region12: #{tpu_custom_call.1} parent=5 // pred_fallthru
        _
      %p157 = scmp.lt.s32.totalorder %s16, 3
      // Predicated region
      $region21: #{tpu_custom_call.1} parent=5 // pred_check
        %p158 = pneg %p157
      $region22: #{tpu_custom_call.1} parent=5 // pred_check_branch
        %160 = sbr.rel (%p158) target = $region24
      $region23: #{tpu_custom_call.1} parent=5 // pred_region
        // Predicated region
        $region25: #{tpu_custom_call.1} parent=23 // pred_check
          %p161 = pneg %p50
        $region26: #{tpu_custom_call.1} parent=23 // pred_check_branch
          %163 = sbr.rel (%p161) target = $region28
        $region27: #{tpu_custom_call.1} parent=23 // pred_region
          %s164 = sand.u32 %s40, 1
          %s165 = scalar_lea.sflag [#allocation4], %s164
          %s166 = sand.u32 %s40, 1
          %s167 = smul.addr %s166, 72
          %s168 = scalar_lea.vmem [#allocation3], %s167
          %s169 = smul.u32 3, %s24
          %s171 = ssub.s32 1152, 1152
          %172 = vsyncadd %s165, %s171
          %s173 = smul.addr %s23, 3
          %s174 = smul.addr %s169, 3
          %s175 = sadd.s32 %s173, %s174
          %s176 = smul.addr %s175, 128
          %s177 = scalar_lea.hbm %s0, %s176
          %s178 = sshll.u32 %s168, 4
          %s179 = int_to_ptr.vmem [resolvable:$true] %s178
          %184 = dma.hbm_to_vmem [thread:$0]  %s177, 1152, %s179, %s165, 384, 384, 24
        $region28: #{tpu_custom_call.1} parent=23 // pred_fallthru
          _
      $region24: #{tpu_custom_call.1} parent=5 // pred_fallthru
        _
      %p185 = scmp.le.s32.totalorder 1, %s16
      %p186 = scmp.lt.s32.totalorder %s16, 4
      %p187 = pnand %p185, %p186
      %p188 = pneg %p187
      // Predicated region
      $region29: #{tpu_custom_call.1} parent=5 // pred_check
        _
      $region30: #{tpu_custom_call.1} parent=5 // pred_check_branch
        %190 = sbr.rel (%p187) target = $region32
      $region31: #{tpu_custom_call.1} parent=5 // pred_region
        %s191 = ssub.s32 %s16, 1
        %s192 = sand.u32 %s43, 1
        %s193 = scalar_lea.sflag [#allocation4], %s192
        %s194 = sand.u32 %s43, 1
        %s195 = smul.addr %s194, 72
        %s196 = scalar_lea.vmem [#allocation3], %s195
        // Predicated region
        $region33: #{tpu_custom_call.1} parent=31 // pred_check
          %p197 = pneg %p56
        $region34: #{tpu_custom_call.1} parent=31 // pred_check_branch
          %199 = sbr.rel (%p197) target = $region36
        $region35: #{tpu_custom_call.1} parent=31 // pred_region
          %200 = dma.done %s193, 1152
        $region36: #{tpu_custom_call.1} parent=31 // pred_fallthru
          _
        // Predicated region
        $region37: #{tpu_custom_call.1} parent=31 // pred_check
          %p201 = pneg %p77
        $region38: #{tpu_custom_call.1} parent=31 // pred_check_branch
          %203 = sbr.rel (%p201) target = $region40
        $region39: #{tpu_custom_call.1} parent=31 // pred_region
          %204 = dma.done [#allocation7], 6144
        $region40: #{tpu_custom_call.1} parent=31 // pred_fallthru
          _
        %s205 = sand.u32 %s43, 1
        %s206 = scalar_lea.sflag [#allocation4], %s205
        %s207 = sand.u32 %s43, 1
        %s208 = smul.addr %s207, 72
        %s209 = scalar_lea.vmem [#allocation3], %s208
        %p210 = pneg %p56
        %p211 = pneg %p53
        %p212 = pneg %p77
        %p213 = pneg %p74
        %p214 = pneg %p98
        %p215 = pneg %p95
        %p216 = pneg %p126
        %p217 = pneg %p123
        %s218 = sand.u32 %s113, 1
        %s219 = scalar_lea.sflag [#allocation5], %s218
        %s220 = sand.u32 %s113, 1
        %s221 = smul.addr %s220, 24
        %s222 = scalar_lea.vmem [#allocation8], %s221
        %s223 = smul.u32 3, %s26
        %s224 = smul.u32 3, %s26
        %p225 = scmp.eq.s32.totalorder %s26, 0
        // Predicated region
        $region41: #{tpu_custom_call.1} parent=31 // pred_check
          %p226 = pneg %p225
        $region42: #{tpu_custom_call.1} parent=31 // pred_check_branch
          %228 = sbr.rel (%p226) target = $region44
        $region43: #{tpu_custom_call.1} parent=31 // pred_region
          %229 = vst [vmem:[#allocation2] sm:$0xff] 0.0
        $region44: #{tpu_custom_call.1} parent=31 // pred_fallthru
          _
        %v230 = vld [vmem:[#allocation6] sm:$0xff]
        %v231 = vld [vmem:[#allocation6 + $0x8] sm:$0xff]
        %v232 = vld [vmem:[#allocation6 + $0x10] sm:$0xff]
        %v233 = vld [vmem:[#allocation6 + $0x18] sm:$0xff]
        %v234 = vld [vmem:[#allocation6 + $0x20] sm:$0xff]
        %v235 = vld [vmem:[#allocation6 + $0x28] sm:$0xff]
        %v236 = vld [vmem:[#allocation6 + $0x30] sm:$0xff]
        %v237 = vld [vmem:[#allocation6 + $0x38] sm:$0xff]
        %v238 = vld [vmem:[#allocation6 + $0x40] sm:$0xff]
        %v239 = vld [vmem:[#allocation6 + $0x48] sm:$0xff]
        %v240 = vld [vmem:[#allocation6 + $0x50] sm:$0xff]
        %v241 = vld [vmem:[#allocation6 + $0x58] sm:$0xff]
        %v242 = vld [vmem:[#allocation6 + $0x60] sm:$0xff]
        %v243 = vld [vmem:[#allocation6 + $0x68] sm:$0xff]
        %v244 = vld [vmem:[#allocation6 + $0x70] sm:$0xff]
        %v245 = vld [vmem:[#allocation6 + $0x78] sm:$0xff]
        %v246 = vld [vmem:[#allocation6 + $0x80] sm:$0xff]
        %v247 = vld [vmem:[#allocation6 + $0x88] sm:$0xff]
        %v248 = vld [vmem:[#allocation6 + $0x90] sm:$0xff]
        %v249 = vld [vmem:[#allocation6 + $0x98] sm:$0xff]
        %v250 = vld [vmem:[#allocation6 + $0xa0] sm:$0xff]
        %v251 = vld [vmem:[#allocation6 + $0xa8] sm:$0xff]
        %v252 = vld [vmem:[#allocation6 + $0xb0] sm:$0xff]
        %v253 = vld [vmem:[#allocation6 + $0xb8] sm:$0xff]
        %v254 = vld [vmem:[#allocation6 + $0xc0] sm:$0xff]
        %v255 = vld [vmem:[#allocation6 + $0xc8] sm:$0xff]
        %v256 = vld [vmem:[#allocation6 + $0xd0] sm:$0xff]
        %v257 = vld [vmem:[#allocation6 + $0xd8] sm:$0xff]
        %v258 = vld [vmem:[#allocation6 + $0xe0] sm:$0xff]
        %v259 = vld [vmem:[#allocation6 + $0xe8] sm:$0xff]
        %v260 = vld [vmem:[#allocation6 + $0xf0] sm:$0xff]
        %v261 = vld [vmem:[#allocation6 + $0xf8] sm:$0xff]
        %v262 = vld [vmem:[#allocation6 + $0x100] sm:$0xff]
        %v263 = vld [vmem:[#allocation6 + $0x108] sm:$0xff]
        %v264 = vld [vmem:[#allocation6 + $0x110] sm:$0xff]
        %v265 = vld [vmem:[#allocation6 + $0x118] sm:$0xff]
        %v266 = vld [vmem:[#allocation6 + $0x120] sm:$0xff]
        %v267 = vld [vmem:[#allocation6 + $0x128] sm:$0xff]
        %v268 = vld [vmem:[#allocation6 + $0x130] sm:$0xff]
        %v269 = vld [vmem:[#allocation6 + $0x138] sm:$0xff]
        %v270 = vld [vmem:[#allocation6 + $0x140] sm:$0xff]
        %v271 = vld [vmem:[#allocation6 + $0x148] sm:$0xff]
        %v272 = vld [vmem:[#allocation6 + $0x150] sm:$0xff]
        %v273 = vld [vmem:[#allocation6 + $0x158] sm:$0xff]
        %v274 = vld [vmem:[#allocation6 + $0x160] sm:$0xff]
        %v275 = vld [vmem:[#allocation6 + $0x168] sm:$0xff]
        %v276 = vld [vmem:[#allocation6 + $0x170] sm:$0xff]
        %v277 = vld [vmem:[#allocation6 + $0x178] sm:$0xff]
        %v278 = vld [vmem:[%s2] sm:$0x1]
        %v280 = vlaneseq
        %v281 = vshrl.u32 %v280, 7
        %v282 = vsub.s32 0, %v281
        %v283 = vrot.slane %v278, %v282
        %v285 = vld [vmem:[#allocation2] sm:$0xff]
        %v286 = vld [vmem:[%s196] sm:$0xff]
        %v287 = vld [vmem:[%s196 + $0x8] sm:$0xff]
        %v288 = vld [vmem:[%s196 + $0x10] sm:$0xff]
        %289 = vmatprep.subr.mxu0 %v231
        %290 = vmatpush1.msra.mxu0 %v230
        %291 = vmatprep.subr.mxu0 %v234
        %292 = vmatpush1.msra.mxu0 %v233
        %293 = vmatprep.subr.mxu0 %v237
        %294 = vmatpush1.msra.mxu0 %v236
        %295 = vmatprep.subr.mxu0 %v240
        %296 = vmatpush1.msra.mxu0 %v239
        %297 = vmatprep.subr.mxu0 %v243
        %298 = vmatpush1.msra.mxu0 %v242
        %299 = vmatprep.subr.mxu0 %v246
        %300 = vmatpush1.msra.mxu0 %v245
        %301 = vmatprep.subr.mxu0 %v249
        %302 = vmatpush1.msra.mxu0 %v248
        %303 = vmatprep.subr.mxu0 %v252
        %304 = vmatpush1.msra.mxu0 %v251
        %305 = vmatprep.subr.mxu0 %v255
        %306 = vmatpush1.msra.mxu0 %v254
        %307 = vmatprep.subr.mxu0 %v258
        %308 = vmatpush1.msra.mxu0 %v257
        %309 = vmatprep.subr.mxu0 %v261
        %310 = vmatpush1.msra.mxu0 %v260
        %311 = vmatprep.subr.mxu0 %v264
        %312 = vmatpush1.msra.mxu0 %v263
        %313 = vmatprep.subr.mxu0 %v267
        %314 = vmatpush1.msra.mxu0 %v266
        %315 = vmatprep.subr.mxu0 %v270
        %316 = vmatpush1.msra.mxu0 %v269
        %317 = vmatprep.subr.mxu0 %v273
        %318 = vmatpush1.msra.mxu0 %v272
        %319 = vmatprep.subr.mxu0 %v276
        %320 = vmatpush1.msra.mxu0 %v275
        %321 = vmatprep.subr.mxu0 0.0
        %322 = vmatpush1.msra.mxu0 0.0
        %323 = vmatprep.subr.mxu0 0.0
        %324 = vmatpush1.msra.mxu0 0.0
        %325 = vmatprep.subr.mxu0 0.0
        %326 = vmatpush1.msra.mxu0 0.0
        %327 = vmatprep.subr.mxu0 0.0
        %328 = vmatpush1.msra.mxu0 0.0
        %329 = vmatprep.subr.mxu0 0.0
        %330 = vmatpush1.msra.mxu0 0.0
        %331 = vmatprep.subr.mxu0 0.0
        %332 = vmatpush1.msra.mxu0 0.0
        %333 = vmatprep.subr.mxu0 0.0
        %334 = vmatpush1.msra.mxu0 0.0
        %335 = vmatprep.subr.mxu0 0.0
        %336 = vmatpush1.msra.mxu0 0.0
        %337 = vmatprep.subr.mxu0 0.0
        %338 = vmatpush1.msra.mxu0 0.0
        %339 = vmatprep.subr.mxu0 0.0
        %340 = vmatpush1.msra.mxu0 0.0
        %341 = vmatprep.subr.mxu0 0.0
        %342 = vmatpush1.msra.mxu0 0.0
        %343 = vmatprep.subr.mxu0 0.0
        %344 = vmatpush1.msra.mxu0 0.0
        %345 = vmatprep.subr.mxu0 0.0
        %346 = vmatpush1.msra.mxu0 0.0
        %347 = vmatprep.subr.mxu0 0.0
        %348 = vmatpush1.msra.mxu0 0.0
        %349 = vmatprep.subr.mxu0 0.0
        %350 = vmatpush1.msra.mxu0 0.0
        %351 = vmatprep.subr.mxu0 0.0
        %352 = vmatpush1.msra.mxu0 0.0
        %353 = vmatprep.mubr.f32.mxu0 0.0
        %354 = vmatmul.mubr.f32.gmra.mrb[0].mxu0 %v285
        %v355 = vpop.f32.mrb[0].mxu0
        %v356 = vadd.f32 0.0, %v355
        %v357 = vpop.f32.mrb[0].mxu0
        %v358 = vadd.f32 0.0, %v357
        %359 = vdwg.mxu0
        %360 = vmatprep.subr.mxu0 0.0
        %361 = vmatpush1.msra.mxu0 %v232
        %362 = vmatprep.subr.mxu0 0.0
        %363 = vmatpush1.msra.mxu0 %v235
        %364 = vmatprep.subr.mxu0 0.0
        %365 = vmatpush1.msra.mxu0 %v238
        %366 = vmatprep.subr.mxu0 0.0
        %367 = vmatpush1.msra.mxu0 %v241
        %368 = vmatprep.subr.mxu0 0.0
        %369 = vmatpush1.msra.mxu0 %v244
        %370 = vmatprep.subr.mxu0 0.0
        %371 = vmatpush1.msra.mxu0 %v247
        %372 = vmatprep.subr.mxu0 0.0
        %373 = vmatpush1.msra.mxu0 %v250
        %374 = vmatprep.subr.mxu0 0.0
        %375 = vmatpush1.msra.mxu0 %v253
        %376 = vmatprep.subr.mxu0 0.0
        %377 = vmatpush1.msra.mxu0 %v256
        %378 = vmatprep.subr.mxu0 0.0
        %379 = vmatpush1.msra.mxu0 %v259
        %380 = vmatprep.subr.mxu0 0.0
        %381 = vmatpush1.msra.mxu0 %v262
        %382 = vmatprep.subr.mxu0 0.0
        %383 = vmatpush1.msra.mxu0 %v265
        %384 = vmatprep.subr.mxu0 0.0
        %385 = vmatpush1.msra.mxu0 %v268
        %386 = vmatprep.subr.mxu0 0.0
        %387 = vmatpush1.msra.mxu0 %v271
        %388 = vmatprep.subr.mxu0 0.0
        %389 = vmatpush1.msra.mxu0 %v274
        %390 = vmatprep.subr.mxu0 0.0
        %391 = vmatpush1.msra.mxu0 %v277
        %392 = vmatprep.subr.mxu0 0.0
        %393 = vmatpush1.msra.mxu0 0.0
        %394 = vmatprep.subr.mxu0 0.0
        %395 = vmatpush1.msra.mxu0 0.0
        %396 = vmatprep.subr.mxu0 0.0
        %397 = vmatpush1.msra.mxu0 0.0
        %398 = vmatprep.subr.mxu0 0.0
        %399 = vmatpush1.msra.mxu0 0.0
        %400 = vmatprep.subr.mxu0 0.0
        %401 = vmatpush1.msra.mxu0 0.0
        %402 = vmatprep.subr.mxu0 0.0
        %403 = vmatpush1.msra.mxu0 0.0
        %404 = vmatprep.subr.mxu0 0.0
        %405 = vmatpush1.msra.mxu0 0.0
        %406 = vmatprep.subr.mxu0 0.0
        %407 = vmatpush1.msra.mxu0 0.0
        %408 = vmatprep.subr.mxu0 0.0
        %409 = vmatpush1.msra.mxu0 0.0
        %410 = vmatprep.subr.mxu0 0.0
        %411 = vmatpush1.msra.mxu0 0.0
        %412 = vmatprep.subr.mxu0 0.0
        %413 = vmatpush1.msra.mxu0 0.0
        %414 = vmatprep.subr.mxu0 0.0
        %415 = vmatpush1.msra.mxu0 0.0
        %416 = vmatprep.subr.mxu0 0.0
        %417 = vmatpush1.msra.mxu0 0.0
        %418 = vmatprep.subr.mxu0 0.0
        %419 = vmatpush1.msra.mxu0 0.0
        %420 = vmatprep.subr.mxu0 0.0
        %421 = vmatpush1.msra.mxu0 0.0
        %422 = vmatprep.subr.mxu0 0.0
        %423 = vmatpush1.msra.mxu0 0.0
        %424 = vmatprep.mubr.f32.mxu0 0.0
        %425 = vmatmul.mubr.f32.gmra.mrb[0].mxu0 %v285
        %v426 = vpop.f32.mrb[0].mxu0
        %v427 = vadd.f32 0.0, %v426
        %v428 = vpop.f32.mrb[0].mxu0
        %429 = vdwg.mxu0
        %v430 = vadd.f32 %v286, %v356
        %v431 = vmul.f32 %v430, 0.5
        %v432 = vtanh.pop %v431
        %v433 = vadd.f32 %v432, 1.0
        %v434 = vmul.f32 %v433, 0.5
        %v435 = vadd.f32 %v287, %v358
        %v436 = vmul.f32 %v435, 0.5
        %v437 = vtanh.pop %v436
        %v438 = vadd.f32 %v437, 1.0
        %v439 = vmul.f32 %v438, 0.5
        %v440 = vadd.f32 %v427, %v283
        %v441 = vmul.f32 %v434, %v440
        %v442 = vadd.f32 %v288, %v441
        %v443 = vtanh.pop %v442
        %v444 = vsub.f32 %v285, %v443
        %v445 = vmul.f32 %v439, %v444
        %v446 = vadd.f32 %v443, %v445
        %447 = vst [vmem:[%s222] sm:$0xff] %v446
        %s448 = scalar_lea.vmem %s196, 24 [#allocation3]
        %v449 = vld [vmem:[%s448] sm:$0xff]
        %v450 = vld [vmem:[%s448 + $0x8] sm:$0xff]
        %v451 = vld [vmem:[%s448 + $0x10] sm:$0xff]
        %452 = vmatprep.subr.mxu0 %v231
        %453 = vmatpush1.msra.mxu0 %v230
        %454 = vmatprep.subr.mxu0 %v234
        %455 = vmatpush1.msra.mxu0 %v233
        %456 = vmatprep.subr.mxu0 %v237
        %457 = vmatpush1.msra.mxu0 %v236
        %458 = vmatprep.subr.mxu0 %v240
        %459 = vmatpush1.msra.mxu0 %v239
        %460 = vmatprep.subr.mxu0 %v243
        %461 = vmatpush1.msra.mxu0 %v242
        %462 = vmatprep.subr.mxu0 %v246
        %463 = vmatpush1.msra.mxu0 %v245
        %464 = vmatprep.subr.mxu0 %v249
        %465 = vmatpush1.msra.mxu0 %v248
        %466 = vmatprep.subr.mxu0 %v252
        %467 = vmatpush1.msra.mxu0 %v251
        %468 = vmatprep.subr.mxu0 %v255
        %469 = vmatpush1.msra.mxu0 %v254
        %470 = vmatprep.subr.mxu0 %v258
        %471 = vmatpush1.msra.mxu0 %v257
        %472 = vmatprep.subr.mxu0 %v261
        %473 = vmatpush1.msra.mxu0 %v260
        %474 = vmatprep.subr.mxu0 %v264
        %475 = vmatpush1.msra.mxu0 %v263
        %476 = vmatprep.subr.mxu0 %v267
        %477 = vmatpush1.msra.mxu0 %v266
        %478 = vmatprep.subr.mxu0 %v270
        %479 = vmatpush1.msra.mxu0 %v269
        %480 = vmatprep.subr.mxu0 %v273
        %481 = vmatpush1.msra.mxu0 %v272
        %482 = vmatprep.subr.mxu0 %v276
        %483 = vmatpush1.msra.mxu0 %v275
        %484 = vmatprep.subr.mxu0 0.0
        %485 = vmatpush1.msra.mxu0 0.0
        %486 = vmatprep.subr.mxu0 0.0
        %487 = vmatpush1.msra.mxu0 0.0
        %488 = vmatprep.subr.mxu0 0.0
        %489 = vmatpush1.msra.mxu0 0.0
        %490 = vmatprep.subr.mxu0 0.0
        %491 = vmatpush1.msra.mxu0 0.0
        %492 = vmatprep.subr.mxu0 0.0
        %493 = vmatpush1.msra.mxu0 0.0
        %494 = vmatprep.subr.mxu0 0.0
        %495 = vmatpush1.msra.mxu0 0.0
        %496 = vmatprep.subr.mxu0 0.0
        %497 = vmatpush1.msra.mxu0 0.0
        %498 = vmatprep.subr.mxu0 0.0
        %499 = vmatpush1.msra.mxu0 0.0
        %500 = vmatprep.subr.mxu0 0.0
        %501 = vmatpush1.msra.mxu0 0.0
        %502 = vmatprep.subr.mxu0 0.0
        %503 = vmatpush1.msra.mxu0 0.0
        %504 = vmatprep.subr.mxu0 0.0
        %505 = vmatpush1.msra.mxu0 0.0
        %506 = vmatprep.subr.mxu0 0.0
        %507 = vmatpush1.msra.mxu0 0.0
        %508 = vmatprep.subr.mxu0 0.0
        %509 = vmatpush1.msra.mxu0 0.0
        %510 = vmatprep.subr.mxu0 0.0
        %511 = vmatpush1.msra.mxu0 0.0
        %512 = vmatprep.subr.mxu0 0.0
        %513 = vmatpush1.msra.mxu0 0.0
        %514 = vmatprep.subr.mxu0 0.0
        %515 = vmatpush1.msra.mxu0 0.0
        %516 = vmatprep.mubr.f32.mxu0 0.0
        %517 = vmatmul.mubr.f32.gmra.mrb[0].mxu0 %v446
        %v518 = vpop.f32.mrb[0].mxu0
        %v519 = vadd.f32 0.0, %v518
        %v520 = vpop.f32.mrb[0].mxu0
        %v521 = vadd.f32 0.0, %v520
        %522 = vdwg.mxu0
        %523 = vmatprep.subr.mxu0 0.0
        %524 = vmatpush1.msra.mxu0 %v232
        %525 = vmatprep.subr.mxu0 0.0
        %526 = vmatpush1.msra.mxu0 %v235
        %527 = vmatprep.subr.mxu0 0.0
        %528 = vmatpush1.msra.mxu0 %v238
        %529 = vmatprep.subr.mxu0 0.0
        %530 = vmatpush1.msra.mxu0 %v241
        %531 = vmatprep.subr.mxu0 0.0
        %532 = vmatpush1.msra.mxu0 %v244
        %533 = vmatprep.subr.mxu0 0.0
        %534 = vmatpush1.msra.mxu0 %v247
        %535 = vmatprep.subr.mxu0 0.0
        %536 = vmatpush1.msra.mxu0 %v250
        %537 = vmatprep.subr.mxu0 0.0
        %538 = vmatpush1.msra.mxu0 %v253
        %539 = vmatprep.subr.mxu0 0.0
        %540 = vmatpush1.msra.mxu0 %v256
        %541 = vmatprep.subr.mxu0 0.0
        %542 = vmatpush1.msra.mxu0 %v259
        %543 = vmatprep.subr.mxu0 0.0
        %544 = vmatpush1.msra.mxu0 %v262
        %545 = vmatprep.subr.mxu0 0.0
        %546 = vmatpush1.msra.mxu0 %v265
        %547 = vmatprep.subr.mxu0 0.0
        %548 = vmatpush1.msra.mxu0 %v268
        %549 = vmatprep.subr.mxu0 0.0
        %550 = vmatpush1.msra.mxu0 %v271
        %551 = vmatprep.subr.mxu0 0.0
        %552 = vmatpush1.msra.mxu0 %v274
        %553 = vmatprep.subr.mxu0 0.0
        %554 = vmatpush1.msra.mxu0 %v277
        %555 = vmatprep.subr.mxu0 0.0
        %556 = vmatpush1.msra.mxu0 0.0
        %557 = vmatprep.subr.mxu0 0.0
        %558 = vmatpush1.msra.mxu0 0.0
        %559 = vmatprep.subr.mxu0 0.0
        %560 = vmatpush1.msra.mxu0 0.0
        %561 = vmatprep.subr.mxu0 0.0
        %562 = vmatpush1.msra.mxu0 0.0
        %563 = vmatprep.subr.mxu0 0.0
        %564 = vmatpush1.msra.mxu0 0.0
        %565 = vmatprep.subr.mxu0 0.0
        %566 = vmatpush1.msra.mxu0 0.0
        %567 = vmatprep.subr.mxu0 0.0
        %568 = vmatpush1.msra.mxu0 0.0
        %569 = vmatprep.subr.mxu0 0.0
        %570 = vmatpush1.msra.mxu0 0.0
        %571 = vmatprep.subr.mxu0 0.0
        %572 = vmatpush1.msra.mxu0 0.0
        %573 = vmatprep.subr.mxu0 0.0
        %574 = vmatpush1.msra.mxu0 0.0
        %575 = vmatprep.subr.mxu0 0.0
        %576 = vmatpush1.msra.mxu0 0.0
        %577 = vmatprep.subr.mxu0 0.0
        %578 = vmatpush1.msra.mxu0 0.0
        %579 = vmatprep.subr.mxu0 0.0
        %580 = vmatpush1.msra.mxu0 0.0
        %581 = vmatprep.subr.mxu0 0.0
        %582 = vmatpush1.msra.mxu0 0.0
        %583 = vmatprep.subr.mxu0 0.0
        %584 = vmatpush1.msra.mxu0 0.0
        %585 = vmatprep.subr.mxu0 0.0
        %586 = vmatpush1.msra.mxu0 0.0
        %587 = vmatprep.mubr.f32.mxu0 0.0
        %588 = vmatmul.mubr.f32.gmra.mrb[0].mxu0 %v446
        %v589 = vpop.f32.mrb[0].mxu0
        %v590 = vadd.f32 0.0, %v589
        %v591 = vpop.f32.mrb[0].mxu0
        %592 = vdwg.mxu0
        %v593 = vadd.f32 %v449, %v519
        %v594 = vmul.f32 %v593, 0.5
        %v595 = vtanh.pop %v594
        %v596 = vadd.f32 %v595, 1.0
        %v597 = vmul.f32 %v596, 0.5
        %v598 = vadd.f32 %v450, %v521
        %v599 = vmul.f32 %v598, 0.5
        %v600 = vtanh.pop %v599
        %v601 = vadd.f32 %v600, 1.0
        %v602 = vmul.f32 %v601, 0.5
        %v603 = vadd.f32 %v590, %v283
        %v604 = vmul.f32 %v597, %v603
        %v605 = vadd.f32 %v451, %v604
        %v606 = vtanh.pop %v605
        %v607 = vsub.f32 %v446, %v606
        %v608 = vmul.f32 %v602, %v607
        %v609 = vadd.f32 %v606, %v608
        %s610 = scalar_lea.vmem %s222, 8 [#allocation8]
        %611 = vst [vmem:[%s610] sm:$0xff] %v609
        %s612 = scalar_lea.vmem %s196, 48 [#allocation3]
        %v613 = vld [vmem:[%s612] sm:$0xff]
        %v614 = vld [vmem:[%s612 + $0x8] sm:$0xff]
        %v615 = vld [vmem:[%s612 + $0x10] sm:$0xff]
        %616 = vmatprep.subr.mxu0 %v231
        %617 = vmatpush1.msra.mxu0 %v230
        %618 = vmatprep.subr.mxu0 %v234
        %619 = vmatpush1.msra.mxu0 %v233
        %620 = vmatprep.subr.mxu0 %v237
        %621 = vmatpush1.msra.mxu0 %v236
        %622 = vmatprep.subr.mxu0 %v240
        %623 = vmatpush1.msra.mxu0 %v239
        %624 = vmatprep.subr.mxu0 %v243
        %625 = vmatpush1.msra.mxu0 %v242
        %626 = vmatprep.subr.mxu0 %v246
        %627 = vmatpush1.msra.mxu0 %v245
        %628 = vmatprep.subr.mxu0 %v249
        %629 = vmatpush1.msra.mxu0 %v248
        %630 = vmatprep.subr.mxu0 %v252
        %631 = vmatpush1.msra.mxu0 %v251
        %632 = vmatprep.subr.mxu0 %v255
        %633 = vmatpush1.msra.mxu0 %v254
        %634 = vmatprep.subr.mxu0 %v258
        %635 = vmatpush1.msra.mxu0 %v257
        %636 = vmatprep.subr.mxu0 %v261
        %637 = vmatpush1.msra.mxu0 %v260
        %638 = vmatprep.subr.mxu0 %v264
        %639 = vmatpush1.msra.mxu0 %v263
        %640 = vmatprep.subr.mxu0 %v267
        %641 = vmatpush1.msra.mxu0 %v266
        %642 = vmatprep.subr.mxu0 %v270
        %643 = vmatpush1.msra.mxu0 %v269
        %644 = vmatprep.subr.mxu0 %v273
        %645 = vmatpush1.msra.mxu0 %v272
        %646 = vmatprep.subr.mxu0 %v276
        %647 = vmatpush1.msra.mxu0 %v275
        %648 = vmatprep.subr.mxu0 0.0
        %649 = vmatpush1.msra.mxu0 0.0
        %650 = vmatprep.subr.mxu0 0.0
        %651 = vmatpush1.msra.mxu0 0.0
        %652 = vmatprep.subr.mxu0 0.0
        %653 = vmatpush1.msra.mxu0 0.0
        %654 = vmatprep.subr.mxu0 0.0
        %655 = vmatpush1.msra.mxu0 0.0
        %656 = vmatprep.subr.mxu0 0.0
        %657 = vmatpush1.msra.mxu0 0.0
        %658 = vmatprep.subr.mxu0 0.0
        %659 = vmatpush1.msra.mxu0 0.0
        %660 = vmatprep.subr.mxu0 0.0
        %661 = vmatpush1.msra.mxu0 0.0
        %662 = vmatprep.subr.mxu0 0.0
        %663 = vmatpush1.msra.mxu0 0.0
        %664 = vmatprep.subr.mxu0 0.0
        %665 = vmatpush1.msra.mxu0 0.0
        %666 = vmatprep.subr.mxu0 0.0
        %667 = vmatpush1.msra.mxu0 0.0
        %668 = vmatprep.subr.mxu0 0.0
        %669 = vmatpush1.msra.mxu0 0.0
        %670 = vmatprep.subr.mxu0 0.0
        %671 = vmatpush1.msra.mxu0 0.0
        %672 = vmatprep.subr.mxu0 0.0
        %673 = vmatpush1.msra.mxu0 0.0
        %674 = vmatprep.subr.mxu0 0.0
        %675 = vmatpush1.msra.mxu0 0.0
        %676 = vmatprep.subr.mxu0 0.0
        %677 = vmatpush1.msra.mxu0 0.0
        %678 = vmatprep.subr.mxu0 0.0
        %679 = vmatpush1.msra.mxu0 0.0
        %680 = vmatprep.mubr.f32.mxu0 0.0
        %681 = vmatmul.mubr.f32.gmra.mrb[0].mxu0 %v609
        %v682 = vpop.f32.mrb[0].mxu0
        %v683 = vadd.f32 0.0, %v682
        %v684 = vpop.f32.mrb[0].mxu0
        %v685 = vadd.f32 0.0, %v684
        %686 = vdwg.mxu0
        %687 = vmatprep.subr.mxu0 0.0
        %688 = vmatpush1.msra.mxu0 %v232
        %689 = vmatprep.subr.mxu0 0.0
        %690 = vmatpush1.msra.mxu0 %v235
        %691 = vmatprep.subr.mxu0 0.0
        %692 = vmatpush1.msra.mxu0 %v238
        %693 = vmatprep.subr.mxu0 0.0
        %694 = vmatpush1.msra.mxu0 %v241
        %695 = vmatprep.subr.mxu0 0.0
        %696 = vmatpush1.msra.mxu0 %v244
        %697 = vmatprep.subr.mxu0 0.0
        %698 = vmatpush1.msra.mxu0 %v247
        %699 = vmatprep.subr.mxu0 0.0
        %700 = vmatpush1.msra.mxu0 %v250
        %701 = vmatprep.subr.mxu0 0.0
        %702 = vmatpush1.msra.mxu0 %v253
        %703 = vmatprep.subr.mxu0 0.0
        %704 = vmatpush1.msra.mxu0 %v256
        %705 = vmatprep.subr.mxu0 0.0
        %706 = vmatpush1.msra.mxu0 %v259
        %707 = vmatprep.subr.mxu0 0.0
        %708 = vmatpush1.msra.mxu0 %v262
        %709 = vmatprep.subr.mxu0 0.0
        %710 = vmatpush1.msra.mxu0 %v265
        %711 = vmatprep.subr.mxu0 0.0
        %712 = vmatpush1.msra.mxu0 %v268
        %713 = vmatprep.subr.mxu0 0.0
        %714 = vmatpush1.msra.mxu0 %v271
        %715 = vmatprep.subr.mxu0 0.0
        %716 = vmatpush1.msra.mxu0 %v274
        %717 = vmatprep.subr.mxu0 0.0
        %718 = vmatpush1.msra.mxu0 %v277
        %719 = vmatprep.subr.mxu0 0.0
        %720 = vmatpush1.msra.mxu0 0.0
        %721 = vmatprep.subr.mxu0 0.0
        %722 = vmatpush1.msra.mxu0 0.0
        %723 = vmatprep.subr.mxu0 0.0
        %724 = vmatpush1.msra.mxu0 0.0
        %725 = vmatprep.subr.mxu0 0.0
        %726 = vmatpush1.msra.mxu0 0.0
        %727 = vmatprep.subr.mxu0 0.0
        %728 = vmatpush1.msra.mxu0 0.0
        %729 = vmatprep.subr.mxu0 0.0
        %730 = vmatpush1.msra.mxu0 0.0
        %731 = vmatprep.subr.mxu0 0.0
        %732 = vmatpush1.msra.mxu0 0.0
        %733 = vmatprep.subr.mxu0 0.0
        %734 = vmatpush1.msra.mxu0 0.0
        %735 = vmatprep.subr.mxu0 0.0
        %736 = vmatpush1.msra.mxu0 0.0
        %737 = vmatprep.subr.mxu0 0.0
        %738 = vmatpush1.msra.mxu0 0.0
        %739 = vmatprep.subr.mxu0 0.0
        %740 = vmatpush1.msra.mxu0 0.0
        %741 = vmatprep.subr.mxu0 0.0
        %742 = vmatpush1.msra.mxu0 0.0
        %743 = vmatprep.subr.mxu0 0.0
        %744 = vmatpush1.msra.mxu0 0.0
        %745 = vmatprep.subr.mxu0 0.0
        %746 = vmatpush1.msra.mxu0 0.0
        %747 = vmatprep.subr.mxu0 0.0
        %748 = vmatpush1.msra.mxu0 0.0
        %749 = vmatprep.subr.mxu0 0.0
        %750 = vmatpush1.msra.mxu0 0.0
        %751 = vmatprep.mubr.f32.mxu0 0.0
        %752 = vmatmul.mubr.f32.gmra.mrb[0].mxu0 %v609
        %v753 = vpop.f32.mrb[0].mxu0
        %v754 = vadd.f32 0.0, %v753
        %v755 = vpop.f32.mrb[0].mxu0
        %756 = vdwg.mxu0
        %v757 = vadd.f32 %v613, %v683
        %v758 = vmul.f32 %v757, 0.5
        %v759 = vtanh.pop %v758
        %v760 = vadd.f32 %v759, 1.0
        %v761 = vmul.f32 %v760, 0.5
        %v762 = vadd.f32 %v614, %v685
        %v763 = vmul.f32 %v762, 0.5
        %v764 = vtanh.pop %v763
        %v765 = vadd.f32 %v764, 1.0
        %v766 = vmul.f32 %v765, 0.5
        %v767 = vadd.f32 %v754, %v283
        %v768 = vmul.f32 %v761, %v767
        %v769 = vadd.f32 %v615, %v768
        %v770 = vtanh.pop %v769
        %v771 = vsub.f32 %v609, %v770
        %v772 = vmul.f32 %v766, %v771
        %v773 = vadd.f32 %v770, %v772
        %s774 = scalar_lea.vmem %s222, 16 [#allocation8]
        %775 = vst [vmem:[%s774] sm:$0xff] %v773
        %776 = vst [vmem:[#allocation2] sm:$0xff] %v773
        %s777 = sand.u32 %s113, 1
        %s778 = scalar_lea.sflag [#allocation5], %s777
        %s779 = sand.u32 %s113, 1
        %s780 = smul.addr %s779, 24
        %s781 = scalar_lea.vmem [#allocation8], %s780
        // Predicated region
        $region45: #{tpu_custom_call.1} parent=31 // pred_check
          %p782 = pneg %p123
        $region46: #{tpu_custom_call.1} parent=31 // pred_check_branch
          %784 = sbr.rel (%p782) target = $region48
        $region47: #{tpu_custom_call.1} parent=31 // pred_region
          %s785 = smul.u32 3, %s26
          %s787 = ssub.s32 384, 384
          %788 = vsyncadd %s778, %s787
          %s789 = sadd.s32 %s25, %s785
          %s790 = smul.addr %s789, 128
          %s791 = scalar_lea.hbm %s3, %s790
          %s792 = sshll.u32 %s781, 4
          %s793 = int_to_ptr.vmem [resolvable:$true] %s792
          %798 = dma.vmem_to_hbm [thread:$0]  %s793, 384, %s791, %s778, 128, 128, 8
        $region48: #{tpu_custom_call.1} parent=31 // pred_fallthru
          _
      $region32: #{tpu_custom_call.1} parent=5 // pred_fallthru
        _
      %p799 = scmp.le.s32.totalorder 2, %s16
      // Predicated region
      $region49: #{tpu_custom_call.1} parent=5 // pred_check
        %p800 = pneg %p799
      $region50: #{tpu_custom_call.1} parent=5 // pred_check_branch
        %802 = sbr.rel (%p800) target = $region52
      $region51: #{tpu_custom_call.1} parent=5 // pred_region
        %s803 = ssub.s32 %s16, 2
        // Predicated region
        $region53: #{tpu_custom_call.1} parent=51 // pred_check
          %p804 = pneg %p129
        $region54: #{tpu_custom_call.1} parent=51 // pred_check_branch
          %806 = sbr.rel (%p804) target = $region56
        $region55: #{tpu_custom_call.1} parent=51 // pred_region
          %s807 = sand.u32 %s114, 1
          %s808 = scalar_lea.sflag [#allocation5], %s807
          %s809 = sand.u32 %s114, 1
          %s810 = smul.addr %s809, 24
          %s811 = scalar_lea.vmem [#allocation8], %s810
          %812 = dma.done %s808, 384
        $region56: #{tpu_custom_call.1} parent=51 // pred_fallthru
          _
      $region52: #{tpu_custom_call.1} parent=5 // pred_fallthru
        _
    $region6: #{tpu_custom_call.1} parent=1 // loop_footer
      %s20 = sadd.s32 1, %s16
    $region7: #{tpu_custom_call.1} parent=1 // loop_footer_branch
      %15 = sbr.rel target = $region3
    $region8: #{tpu_custom_call.1} parent=1 // loop_exit
      _
    %813 = vsyncpa [#allocation4], 1
    %s814 = scalar_lea.sflag [#allocation4], 1
    %815 = vsyncpa %s814, 1
    %816 = vsyncpa [#allocation7], 1
    %817 = vsyncpa [#allocation5], 1
    %s818 = scalar_lea.sflag [#allocation5], 1
    %819 = vsyncpa %s818, 1

</llo_original>
